<compile_context>
chip_gen: v6e
topology: v6e:2x2x1
jax: 0.10.0
libtpu: 0.0.40
codegen_flags: <defaults>
</compile_context>

<pallas_src>
import jax
import jax.numpy as jnp
from jax.experimental import pallas as pl
from jax.experimental.pallas import tpu as pltpu


def _maxpool_agg_kernel(x_ref, wt_ref, b_ref, o_ref):
    # x_ref: (TN*K, D) compute-dtype block; wt_ref: (D, D) pre-transposed weight
    # b_ref: (1, D) f32 bias; o_ref: (TN, D) output block.
    tn, d = o_ref.shape
    k = x_ref.shape[0] // tn
    # One big MXU matmul for the whole block, f32 accumulation.
    s = jnp.dot(x_ref[...], wt_ref[...], preferred_element_type=jnp.float32)   # (TN*K, D)
    # Max over neighbors FIRST (monotonicity: max(lrelu(s+b)) == lrelu(max(s)+b)).
    # k % 8 == 0 is guaranteed by the wrapper, so this sublane split is layout-free.
    m = jnp.max(s.reshape(tn, k, d), axis=1)                                   # (TN, D)
    y = m + b_ref[...]                                                         # bias broadcast
    y = jnp.where(y > 0, y, 0.01 * y)                                          # leaky_relu(0.01)
    o_ref[...] = y.astype(o_ref.dtype)


def _choose_tn(N, K, D, compute_itemsize, out_itemsize):
    """Pick nodes-per-block with lane-padding-aware, double-buffered VMEM accounting."""
    lane_d = -(-D // 128) * 128                       # D is lane-padded to 128 in VMEM
    per_node = (2 * K * lane_d * compute_itemsize     # double-buffered ft rows (compute dtype)
                + K * lane_d * 4                      # f32 matmul intermediate `s`
                + 2 * lane_d * out_itemsize)          # double-buffered output row
    budget = 40 * 1024 * 1024                         # safe under the 48 MiB vmem_limit below
    tn_vmem = max(1, budget // per_node)
    # Megacore / pipeline: aim for >= 4 grid steps when N is big enough to keep tiles large.
    tn_grid = max(8, ((-(-N // 4)) + 7) // 8 * 8) if N >= 32 else N
    tn_mxu = -(-256 // K)                             # fill the MXU M dimension when possible
    tn = min(tn_vmem, tn_grid, N)
    tn = max(tn, min(tn_mxu, N))
    if tn >= N:
        return N                                      # single block covers all nodes
    return max(8, (tn // 8) * 8)                      # multiple of 8 keeps blocks (8,128)-legal


def max_pooling_aggregator(ft, weight, bias, *, tn=None, compute_dtype=jnp.bfloat16):
    """ft: (N, K, D); weight: (D, D) PyTorch layout (out, in); bias: (D,). Returns (N, D)."""
    N, K, D = ft.shape
    out_dtype = ft.dtype

    # Pad the neighbor axis to a multiple of 8 with duplicates of neighbor 0 so the
    # in-kernel sublane split is layout-free for any K.  Duplicates cannot change the max.
    if K % 8 != 0:
        pad = 8 - (K % 8)
        ft = jnp.concatenate([ft, jnp.broadcast_to(ft[:, :1, :], (N, pad, D))], axis=1)
        K = K + pad

    # Cast to the MXU compute dtype upstream: the kernel's dominant HBM traffic (ft) is
    # halved in bf16; accumulation stays f32 inside the kernel.
    x2d = ft.reshape(N * K, D).astype(compute_dtype)   # free, contiguous reshape
    wt = weight.T.astype(compute_dtype)                # transpose ONCE host-side -> (D_in, D_out)
    b2d = bias.reshape(1, D).astype(jnp.float32)

    c_isz = jnp.dtype(compute_dtype).itemsize
    o_isz = jnp.dtype(out_dtype).itemsize
    if tn is None:
        tn = _choose_tn(N, K, D, c_isz, o_isz)

    grid = (pl.cdiv(N, tn),)
    cost = pl.CostEstimate(
        flops=2 * N * K * D * D,
        bytes_accessed=int(x2d.size) * c_isz + N * D * o_isz
        + int(wt.size) * c_isz + int(b2d.size) * 4,
        transcendentals=0,
    )
    return pl.pallas_call(
        _maxpool_agg_kernel,
        out_shape=jax.ShapeDtypeStruct((N, D), out_dtype),
        grid_spec=pltpu.PrefetchScalarGridSpec(
            num_scalar_prefetch=0,
            grid=grid,
            in_specs=[
                pl.BlockSpec((tn * K, D), lambda i: (i, 0)),   # streamed node-neighbor rows
                pl.BlockSpec((D, D), lambda i: (0, 0)),        # resident weight
                pl.BlockSpec((1, D), lambda i: (0, 0)),        # resident bias
            ],
            out_specs=pl.BlockSpec((tn, D), lambda i: (i, 0)),
        ),
        compiler_params=pltpu.CompilerParams(
            dimension_semantics=("parallel",),
            vmem_limit_bytes=48 * 1024 * 1024,   # > v5e/v6e default scoped VMEM, < v7x 64 MiB physical
        ),
        cost_estimate=cost,
    )(x2d, wt, b2d)


def reference(ft, weight, bias):
    y = jnp.einsum("nkd,od->nko", ft, weight) + bias
    y = jnp.where(y > 0, y, 0.01 * y)
    return jnp.max(y, axis=1)


if __name__ == "__main__":
    key = jax.random.PRNGKey(0)
    k_ft, k_w, k_b = jax.random.split(key, 3)

    # Small shapes consistent with the module: num_fc=1 -> single Linear(D, D).
    N, K, D = 4, 8, 32  # nodes, neighbors, input_dim
    ft = jax.random.normal(k_ft, (N, K, D), dtype=jnp.float32)
    bound = 1.0 / (D ** 0.5)  # mimic nn.Linear uniform(-1/sqrt(D), 1/sqrt(D)) init
    weight = jax.random.uniform(k_w, (D, D), jnp.float32, -bound, bound)
    bias = jax.random.uniform(k_b, (D,), jnp.float32, -bound, bound)

    ref = reference(ft, weight, bias)

    # 1) f32 compute path: exact-semantics check against the reference.
    out_f32 = jax.block_until_ready(
        max_pooling_aggregator(ft, weight, bias, compute_dtype=jnp.float32))
    assert out_f32.shape == (N, D)
    assert jnp.allclose(out_f32, ref, atol=1e-5, rtol=1e-5)

    # 2) Default bf16 compute path (halved HBM traffic), looser tolerance for bf16 rounding.
    out_bf16 = jax.block_until_ready(max_pooling_aggregator(ft, weight, bias))
    assert out_bf16.shape == (N, D)
    assert jnp.allclose(out_bf16, ref, atol=5e-2, rtol=5e-2)

    # 3) K not a multiple of 8 (exercises max-invariant neighbor padding) plus a
    #    multi-step ragged grid (N % tn != 0); padded/garbage rows only feed
    #    discarded output rows.
    N2, K2 = 20, 5
    ft2 = jax.random.normal(jax.random.PRNGKey(1), (N2, K2, D), dtype=jnp.float32)
    out2 = jax.block_until_ready(max_pooling_aggregator(ft2, weight, bias, tn=8))
    ref2 = reference(ft2, weight, bias)
    assert out2.shape == (N2, D)
    assert jnp.allclose(out2, ref2, atol=5e-2, rtol=5e-2)

    print("KERNEL_OK")
</pallas_src>

<mosaic_0001>
module attributes {stable_mosaic.version = 11 : i64} {
  func.func @_maxpool_agg_kernel(%arg0: i32, %arg1: memref<32x32xf32, #tpu.memory_space<vmem>>, %arg2: memref<32x32xf32, #tpu.memory_space<vmem>>, %arg3: memref<1x32xf32, #tpu.memory_space<vmem>>, %arg4: memref<4x32xf32, #tpu.memory_space<vmem>>) attributes {dimension_semantics = [#tpu.dimension_semantics<parallel>], iteration_bounds = array<i64: 1>, scalar_prefetch = 0 : i64, scratch_operands = 0 : i64, tpu.core_type = #tpu.core_type<tc>, window_params = [{transform_indices = @transform_0, window_bounds = array<i64: 32, 32>}, {pipeline_mode = #tpu.pipeline_mode<synchronous>, transform_indices = @transform_1, window_bounds = array<i64: 32, 32>}, {pipeline_mode = #tpu.pipeline_mode<synchronous>, transform_indices = @transform_2, window_bounds = array<i64: 1, 32>}, {transform_indices = @transform_3, window_bounds = array<i64: 4, 32>}]} {
    %c0 = arith.constant 0 : index
    %c0_0 = arith.constant 0 : index
    %0 = vector.load %arg1[%c0, %c0_0] : memref<32x32xf32, #tpu.memory_space<vmem>>, vector<32x32xf32>
    %c0_1 = arith.constant 0 : index
    %c0_2 = arith.constant 0 : index
    %1 = vector.load %arg2[%c0_1, %c0_2] : memref<32x32xf32, #tpu.memory_space<vmem>>, vector<32x32xf32>
    %cst = arith.constant dense<0.000000e+00> : vector<32x32xf32>
    %2 = tpu.matmul %0, %1, %cst {dimension_numbers = #tpu.dot_dimension_numbers<[1], [0], [0], [1], [0, 0, 1, 1], [], []>} : vector<32x32xf32>, vector<32x32xf32>, vector<32x32xf32> -> vector<32x32xf32>
    %3 = vector.shape_cast %2 : vector<32x32xf32> to vector<4x8x32xf32>
    %cst_3 = arith.constant dense<0xFF800000> : vector<4x32xf32>
    %4 = vector.multi_reduction <maximumf>, %3, %cst_3 [1] : vector<4x8x32xf32> to vector<4x32xf32>
    %c0_4 = arith.constant 0 : index
    %c0_5 = arith.constant 0 : index
    %5 = vector.load %arg3[%c0_4, %c0_5] : memref<1x32xf32, #tpu.memory_space<vmem>>, vector<1x32xf32>
    %6 = vector.broadcast %5 : vector<1x32xf32> to vector<4x32xf32>
    %7 = arith.addf %4, %6 : vector<4x32xf32>
    %cst_6 = arith.constant 0.000000e+00 : f32
    %8 = vector.broadcast %cst_6 : f32 to vector<4x32xf32>
    %9 = arith.cmpf ogt, %7, %8 : vector<4x32xf32>
    %cst_7 = arith.constant 0.00999999977 : f32
    %10 = vector.broadcast %cst_7 : f32 to vector<4x32xf32>
    %11 = arith.mulf %10, %7 : vector<4x32xf32>
    %12 = arith.select %9, %7, %11 : vector<4x32xi1>, vector<4x32xf32>
    %c0_8 = arith.constant 0 : index
    %c0_9 = arith.constant 0 : index
    %13 = vector.load %arg4[%c0_8, %c0_9] : memref<4x32xf32, #tpu.memory_space<vmem>>, vector<4x32xf32>
    tpu.vector_store %arg4[%c0_8, %c0_9], %12 {strides = array<i32>} : memref<4x32xf32, #tpu.memory_space<vmem>>, vector<4x32xf32>,
    return
  }
  func.func @transform_0(%arg0: i32) -> (i32, i32) {
    %c0_i32 = arith.constant 0 : i32
    %c0_i32_0 = arith.constant 0 : i32
    return %arg0, %c0_i32 : i32, i32
  }
  func.func @transform_1(%arg0: i32) -> (i32, i32) {
    %c0_i32 = arith.constant 0 : i32
    %c0_i32_0 = arith.constant 0 : i32
    %c0_i32_1 = arith.constant 0 : i32
    return %c0_i32, %c0_i32_0 : i32, i32
  }
  func.func @transform_2(%arg0: i32) -> (i32, i32) {
    %c0_i32 = arith.constant 0 : i32
    %c0_i32_0 = arith.constant 0 : i32
    %c0_i32_1 = arith.constant 0 : i32
    return %c0_i32, %c0_i32_0 : i32, i32
  }
  func.func @transform_3(%arg0: i32) -> (i32, i32) {
    %c0_i32 = arith.constant 0 : i32
    %c0_i32_0 = arith.constant 0 : i32
    return %arg0, %c0_i32 : i32, i32
  }
}

</mosaic_0001>

<llo_original>
// kernel: tpu_custom_call.1
$region0: #{tpu_custom_call.1}
  #allocation0 [shape = 'u32[]', space=smem, size = 0x4, offset = 0x4, fixed_abs, tag = 'smem constant byte address 0x4 - core index']
  #allocation1 [shape = 'u32[144,128]{1,0:T(1,128)}', space=vmem, size = 0x12000, scoped, tag = 'internal scratch']
  %s0 = inlined_call_operand.hbm [shape: f32[32,32], index: 0, kind: input, shape index: {}]
  %s1 = inlined_call_operand.hbm [shape: f32[32,32], index: 1, kind: input, shape index: {}]
  %s2 = inlined_call_operand.vmem [shape: f32[1,32], index: 2, kind: input, shape index: {}]
  %s3 = inlined_call_operand.hbm [shape: f32[4,32], index: 3, kind: output, shape index: {}]
  %s4 = sld [smem:[#allocation0]]
  $region30: #{tpu_custom_call.1} parent=0
    _
  %s6 = ssub.s32 1, %s4
  %s7 = scalar_select 0, %s6, %s4
  $region1: #{tpu_custom_call.1} parent=0
    #allocation2 [shape = 'u8[16384]{0}', space=vmem, size = 0x4000, scoped, tag = 'input window, operand 0, single buffered']
    #allocation3 [shape = 's32[1]{0}', space=sflag, size = 0x4, scoped, tag = 'scoped memory for tpu_custom_call.1']
    #allocation4 [shape = 's32[1]{0}', space=sflag, size = 0x4, scoped, tag = 'scoped memory for tpu_custom_call.1']
    #allocation5 [shape = 'u8[16384]{0}', space=vmem, size = 0x4000, scoped, tag = 'input window, operand 1, single buffered']
    #allocation6 [shape = 's32[1]{0}', space=sflag, size = 0x4, scoped, tag = 'scoped memory for tpu_custom_call.1']
    #allocation7 [shape = 'u8[2048]{0}', space=vmem, size = 0x800, scoped, tag = 'output window, operand 0, single buffered']
    %8 = vsyncpa [#allocation3], 0
    %9 = vsyncpa [#allocation6], 0
    %10 = vsyncpa [#allocation4], 0
    // Predicated region
    $region2: #{tpu_custom_call.1} parent=1 // pred_check
      _
    $region3: #{tpu_custom_call.1} parent=1 // pred_check_branch
      %12 = sbr.rel (0) target = $region5
    $region4: #{tpu_custom_call.1} parent=1 // pred_region
      %s14 = ssub.s32 512, 512
      %15 = vsyncadd [#allocation3], %s14
      %s16 = sshll.u32 [#allocation2], 4
      %s17 = int_to_ptr.vmem [resolvable:$true] %s16
      %22 = dma.hbm_to_vmem [thread:$0]  %s0, 512, %s17, [#allocation3], 128, 128, 8
    $region5: #{tpu_custom_call.1} parent=1 // pred_fallthru
      _
    // Predicated region
    $region6: #{tpu_custom_call.1} parent=1 // pred_check
      _
    $region7: #{tpu_custom_call.1} parent=1 // pred_check_branch
      %24 = sbr.rel (0) target = $region9
    $region8: #{tpu_custom_call.1} parent=1 // pred_region
      %s26 = ssub.s32 512, 512
      %27 = vsyncadd [#allocation6], %s26
      %s28 = sshll.u32 [#allocation5], 4
      %s29 = int_to_ptr.vmem [resolvable:$true] %s28
      %34 = dma.hbm_to_vmem [thread:$0]  %s1, 512, %s29, [#allocation6], 128, 128, 8
    $region9: #{tpu_custom_call.1} parent=1 // pred_fallthru
      _
    // Predicated region
    $region10: #{tpu_custom_call.1} parent=1 // pred_check
      _
    $region11: #{tpu_custom_call.1} parent=1 // pred_check_branch
      %36 = sbr.rel (0) target = $region13
    $region12: #{tpu_custom_call.1} parent=1 // pred_region
      _
    $region13: #{tpu_custom_call.1} parent=1 // pred_fallthru
      _
    // Predicated region
    $region14: #{tpu_custom_call.1} parent=1 // pred_check
      _
    $region15: #{tpu_custom_call.1} parent=1 // pred_check_branch
      %38 = sbr.rel (0) target = $region17
    $region16: #{tpu_custom_call.1} parent=1 // pred_region
      %39 = dma.done [#allocation3], 512
    $region17: #{tpu_custom_call.1} parent=1 // pred_fallthru
      _
    // Predicated region
    $region18: #{tpu_custom_call.1} parent=1 // pred_check
      _
    $region19: #{tpu_custom_call.1} parent=1 // pred_check_branch
      %41 = sbr.rel (0) target = $region21
    $region20: #{tpu_custom_call.1} parent=1 // pred_region
      %42 = dma.done [#allocation6], 512
    $region21: #{tpu_custom_call.1} parent=1 // pred_fallthru
      _
    %v43 = vld [vmem:[#allocation2] sm:$0xff]
    %v44 = vld [vmem:[#allocation2 + $0x8] sm:$0xff]
    %v45 = vld [vmem:[#allocation2 + $0x10] sm:$0xff]
    %v46 = vld [vmem:[#allocation2 + $0x18] sm:$0xff]
    %v47 = vld [vmem:[#allocation5] sm:$0xff]
    %v48 = vld [vmem:[#allocation5 + $0x8] sm:$0xff]
    %v49 = vld [vmem:[#allocation5 + $0x10] sm:$0xff]
    %v50 = vld [vmem:[#allocation5 + $0x18] sm:$0xff]
    %vm51 = vcmask 261120
    %v53 = vsel %vm51, %v43, 0
    %v56 = vsel %vm51, %v44, 0
    %v59 = vsel %vm51, %v45, 0
    %v62 = vsel %vm51, %v46, 0
    %64 = vmatprep.subr.mxu0 0.0
    %65 = vmatpush1.msra.mxu0 0.0
    %66 = vmatprep.subr.mxu0 0.0
    %67 = vmatpush1.msra.mxu0 0.0
    %68 = vmatprep.subr.mxu0 0.0
    %69 = vmatpush1.msra.mxu0 0.0
    %70 = vmatprep.subr.mxu0 0.0
    %71 = vmatpush1.msra.mxu0 0.0
    %72 = vmatprep.subr.mxu0 0.0
    %73 = vmatpush1.msra.mxu0 0.0
    %74 = vmatprep.subr.mxu0 0.0
    %75 = vmatpush1.msra.mxu0 0.0
    %76 = vmatprep.subr.mxu0 0.0
    %77 = vmatpush1.msra.mxu0 0.0
    %78 = vmatprep.subr.mxu0 0.0
    %79 = vmatpush1.msra.mxu0 0.0
    %80 = vmatprep.subr.mxu0 0.0
    %81 = vmatpush1.msra.mxu0 0.0
    %82 = vmatprep.subr.mxu0 0.0
    %83 = vmatpush1.msra.mxu0 0.0
    %84 = vmatprep.subr.mxu0 0.0
    %85 = vmatpush1.msra.mxu0 0.0
    %86 = vmatprep.subr.mxu0 0.0
    %87 = vmatpush1.msra.mxu0 0.0
    %88 = vmatprep.subr.mxu0 0.0
    %89 = vmatpush1.msra.mxu0 %v50
    %90 = vmatprep.subr.mxu0 0.0
    %91 = vmatpush1.msra.mxu0 %v49
    %92 = vmatprep.subr.mxu0 0.0
    %93 = vmatpush1.msra.mxu0 %v48
    %94 = vmatprep.subr.mxu0 0.0
    %95 = vmatpush1.msra.mxu0 %v47
    %96 = vmatprep.subr.mxu0 0.0
    %97 = vmatpush2.msra.mxu0 0.0
    %98 = vmatprep.subr.mxu0 0.0
    %99 = vmatpush2.msra.mxu0 0.0
    %100 = vmatprep.subr.mxu0 0.0
    %101 = vmatpush2.msra.mxu0 0.0
    %102 = vmatprep.subr.mxu0 0.0
    %103 = vmatpush2.msra.mxu0 0.0
    %104 = vmatprep.subr.mxu0 0.0
    %105 = vmatpush2.msra.mxu0 0.0
    %106 = vmatprep.subr.mxu0 0.0
    %107 = vmatpush2.msra.mxu0 0.0
    %108 = vmatprep.subr.mxu0 0.0
    %109 = vmatpush2.msra.mxu0 0.0
    %110 = vmatprep.subr.mxu0 0.0
    %111 = vmatpush2.msra.mxu0 0.0
    %112 = vmatprep.subr.mxu0 0.0
    %113 = vmatpush2.msra.mxu0 0.0
    %114 = vmatprep.subr.mxu0 0.0
    %115 = vmatpush2.msra.mxu0 0.0
    %116 = vmatprep.subr.mxu0 0.0
    %117 = vmatpush2.msra.mxu0 0.0
    %118 = vmatprep.subr.mxu0 0.0
    %119 = vmatpush2.msra.mxu0 0.0
    %120 = vmatprep.subr.mxu0 0.0
    %121 = vmatpush2.msra.mxu0 0.0
    %122 = vmatprep.subr.mxu0 0.0
    %123 = vmatpush2.msra.mxu0 0.0
    %124 = vmatprep.subr.mxu0 0.0
    %125 = vmatpush2.msra.mxu0 0.0
    %126 = vmatprep.subr.mxu0 0.0
    %127 = vmatpush2.msra.mxu0 0.0
    %128 = vmatprep.mubr.f32.mxu0 0.0
    %129 = vmatmul.mubr.f32.gmra.mxu0 %v53
    %v130 = vpop.f32.mrf.mxu0
    %v131 = vadd.f32 0.0, %v130
    %v132 = vpop.f32.mrf.mxu0
    %133 = vmatprep.mubr.f32.mxu0 0.0
    %134 = vmatmul.mubr.f32.gmra.mxu0 %v56
    %v135 = vpop.f32.mrf.mxu0
    %v136 = vadd.f32 0.0, %v135
    %v137 = vpop.f32.mrf.mxu0
    %138 = vmatprep.mubr.f32.mxu0 0.0
    %139 = vmatmul.mubr.f32.gmra.mxu0 %v59
    %v140 = vpop.f32.mrf.mxu0
    %v141 = vadd.f32 0.0, %v140
    %v142 = vpop.f32.mrf.mxu0
    %143 = vmatprep.mubr.f32.mxu0 0.0
    %144 = vmatmul.mubr.f32.gmra.mxu0 %v62
    %v145 = vpop.f32.mrf.mxu0
    %v146 = vadd.f32 0.0, %v145
    %v147 = vpop.f32.mrf.mxu0
    %148 = vdwg.mxu0
    %v149 = vsel %vm51, %v131, -inf
    %v150 = vrot.slane %v149, 4
    %v151 = vmax.f32 %v149, %v150
    %v152 = vrot.slane %v151, 2
    %v153 = vmax.f32 %v151, %v152
    %v154 = vrot.slane %v153, 1
    %v155 = vmax.f32 %v153, %v154
    %v156 = vsel %vm51, %v136, -inf
    %v157 = vrot.slane %v156, 4
    %v158 = vmax.f32 %v156, %v157
    %v159 = vrot.slane %v158, 2
    %v160 = vmax.f32 %v158, %v159
    %v161 = vrot.slane %v160, 1
    %v162 = vmax.f32 %v160, %v161
    %v163 = vsel %vm51, %v141, -inf
    %v164 = vrot.slane %v163, 4
    %v165 = vmax.f32 %v163, %v164
    %v166 = vrot.slane %v165, 2
    %v167 = vmax.f32 %v165, %v166
    %v168 = vrot.slane %v167, 1
    %v169 = vmax.f32 %v167, %v168
    %v170 = vsel %vm51, %v146, -inf
    %v171 = vrot.slane %v170, 4
    %v172 = vmax.f32 %v170, %v171
    %v173 = vrot.slane %v172, 2
    %v174 = vmax.f32 %v172, %v173
    %v175 = vrot.slane %v174, 1
    %v176 = vmax.f32 %v174, %v175
    %v177 = vld [vmem:[%s2] sm:$0x1]
    %v179 = vlaneseq
    %v180 = vshrl.u32 %v179, 7
    %v181 = vsub.s32 0, %v180
    %v182 = vrot.slane %v177, %v181
    %v184 = vadd.f32 %v155, %v182
    %v185 = vadd.f32 %v162, %v182
    %v186 = vadd.f32 %v169, %v182
    %v187 = vadd.f32 %v176, %v182
    %vm188 = vcmp.gt.f32.partialorder %v184, 0.0
    %vm189 = vcmp.gt.f32.partialorder %v185, 0.0
    %vm190 = vcmp.gt.f32.partialorder %v186, 0.0
    %vm191 = vcmp.gt.f32.partialorder %v187, 0.0
    %v192 = vmul.f32 %v184, 0.01
    %v193 = vmul.f32 %v185, 0.01
    %v194 = vmul.f32 %v186, 0.01
    %v195 = vmul.f32 %v187, 0.01
    %v196 = vsel %vm188, %v184, %v192
    %v197 = vsel %vm189, %v185, %v193
    %v198 = vsel %vm190, %v186, %v194
    %v199 = vsel %vm191, %v187, %v195
    %v204 = vrot.slane %v197, 7
    %vm205 = vcmask 1041409
    %v206 = vsel %vm205, %v204, %v196
    %v207 = vrot.slane %v198, 6
    %vm208 = vcmask 1042434
    %v209 = vsel %vm208, %v207, %v206
    %v210 = vrot.slane %v199, 5
    %vm211 = vcmask 1043459
    %v212 = vsel %vm211, %v210, %v209
    %vm214 = vcmask 257024
    %215 = vst.msk [vmem:[#allocation7] sm:$0xf] %vm214, %v212
    // Predicated region
    $region22: #{tpu_custom_call.1} parent=1 // pred_check
      _
    $region23: #{tpu_custom_call.1} parent=1 // pred_check_branch
      %217 = sbr.rel (0) target = $region25
    $region24: #{tpu_custom_call.1} parent=1 // pred_region
      %s219 = ssub.s32 64, 64
      %220 = vsyncadd [#allocation4], %s219
      %s222 = sshll.u32 [#allocation7], 4
      %s223 = int_to_ptr.vmem [resolvable:$true] %s222
      %225 = dma.vmem_to_hbm [thread:$0]  %s223, 64, %s3, [#allocation4]
    $region25: #{tpu_custom_call.1} parent=1 // pred_fallthru
      _
    // Predicated region
    $region26: #{tpu_custom_call.1} parent=1 // pred_check
      _
    $region27: #{tpu_custom_call.1} parent=1 // pred_check_branch
      %227 = sbr.rel (0) target = $region29
    $region28: #{tpu_custom_call.1} parent=1 // pred_region
      %228 = dma.done [#allocation4], 64
    $region29: #{tpu_custom_call.1} parent=1 // pred_fallthru
      _
    %229 = vsyncpa [#allocation3], 1
    %230 = vsyncpa [#allocation6], 1
    %231 = vsyncpa [#allocation4], 1

</llo_original>
